<compile_context>
chip_gen: v7x
topology: tpu7x:2x2x1
jax: 0.10.0
libtpu: 0.0.40
codegen_flags: <defaults>
</compile_context>

<pallas_src>
import functools

import jax
import jax.numpy as jnp
from jax import lax
from jax.experimental import pallas as pl
from jax.experimental.pallas import tpu as pltpu


def _round_up(x, m):
    return (x + m - 1) // m * m


def _focal_loss_kernel(x_ref, t_ref, o_ref, *, gamma, alpha, size_average,
                       n_rows, tile_n, mask_rows):
    step = pl.program_id(0)

    @pl.when(step == 0)
    def _init():
        o_ref[...] = jnp.zeros_like(o_ref)

    logits = x_ref[...].astype(jnp.float32)          # (tile_n, C)
    tgt = t_ref[...]                                 # (tile_n, 1) int32
    tn, c = logits.shape

    # --- log-softmax pieces (full log-softmax tile never materialized) --------
    m = jnp.max(logits, axis=-1, keepdims=True)      # (tn, 1)
    shifted = logits - m                             # (tn, C)
    lse = jnp.log(jnp.sum(jnp.exp(shifted), axis=-1, keepdims=True))  # (tn, 1)

    # --- gather shifted[i, tgt[i]] via one-hot select (no XLU gather) ----------
    # NOTE: out-of-range / negative targets contribute gathered=0 here, whereas
    # torch's index_select would raise; targets are assumed to be valid classes.
    col_ids = lax.broadcasted_iota(jnp.int32, (tn, c), 1)
    gathered = jnp.sum(jnp.where(col_ids == tgt, shifted, 0.0),
                       axis=-1, keepdims=True)       # (tn, 1)
    logpt = gathered - lse                           # (tn, 1)

    # --- alpha weighting folded into a single select ---------------------------
    w = jnp.where(tgt > 0, jnp.float32(alpha), jnp.float32(1.0 - alpha))
    logpt_w = logpt * w

    # --- focal modulation, specialized on the (static) gamma -------------------
    if gamma == 0.0:
        loss = -logpt_w                              # (1 - pt)**0 == 1, skip exp/pow
    else:
        pt = jnp.exp(logpt)
        omp = 1.0 - pt
        if gamma == 1.0:
            mod = omp
        elif gamma == 2.0:
            mod = omp * omp
        else:
            mod = jnp.power(omp, jnp.float32(gamma))
        loss = -mod * logpt_w                        # (tn, 1)

    # --- mask rows of the padded last tile -------------------------------------
    if mask_rows:
        row_ids = step * tile_n + lax.broadcasted_iota(jnp.int32, (tn, 1), 0)
        loss = jnp.where(row_ids < n_rows, loss, 0.0)

    # --- accumulate into the VMEM-resident (1,1) output block ------------------
    o_ref[...] += jnp.sum(loss, axis=0, keepdims=True)

    @pl.when(step == pl.num_programs(0) - 1)
    def _finalize():
        if size_average:
            o_ref[...] = o_ref[...] * jnp.float32(1.0 / n_rows)


def focal_loss(logits, target, *, gamma=0.0, alpha=0.25, size_average=True,
               tile_n=None, vmem_budget_bytes=4 * 1024 * 1024):
    """logits: (N, C) float32/bfloat16; target: (N,) int -> scalar float32."""
    n, c = logits.shape
    target2d = target.reshape(n, 1).astype(jnp.int32)

    if tile_n is None:
        # Double-buffered per-row VMEM cost: logits row (C * itemsize) plus the
        # lane-padded (128 lanes) int32 target row.  Budget is conservative so
        # it fits the scoped-VMEM default on every generation (v5e 16 MiB,
        # v6e/v7x 32 MiB) with headroom for compute vregs.
        itemsize = jnp.dtype(logits.dtype).itemsize
        bytes_per_row = 2 * (c * itemsize + 128 * 4)
        tile_n = max(8, min(1024, vmem_budget_bytes // bytes_per_row))
    tile_n = max(8, min(int(tile_n), _round_up(n, 8)))
    tile_n = (tile_n // 8) * 8                       # f32 sublane multiple
    num_tiles = int(pl.cdiv(n, tile_n))
    mask_rows = (n % tile_n) != 0

    kernel = functools.partial(
        _focal_loss_kernel,
        gamma=float(gamma),
        alpha=float(alpha),
        size_average=bool(size_average),
        n_rows=n,
        tile_n=tile_n,
        mask_rows=mask_rows,
    )

    out = pl.pallas_call(
        kernel,
        out_shape=jax.ShapeDtypeStruct((1, 1), jnp.float32),
        grid_spec=pltpu.PrefetchScalarGridSpec(
            num_scalar_prefetch=0,
            grid=(num_tiles,),
            in_specs=[
                pl.BlockSpec((tile_n, c), lambda i: (i, 0)),   # logits tile
                pl.BlockSpec((tile_n, 1), lambda i: (i, 0)),   # target tile
            ],
            # Constant index map -> output stays resident (accumulator),
            # single HBM writeback at the end.
            out_specs=pl.BlockSpec((1, 1), lambda i: (0, 0)),
        ),
        compiler_params=pltpu.CompilerParams(
            dimension_semantics=("arbitrary",),      # running scalar reduction
        ),
    )(logits, target2d)
    return out[0, 0]


def _reference(logits, target, gamma, alpha, size_average):
    logsm = jax.nn.log_softmax(logits.astype(jnp.float32), axis=-1)
    logpt = jnp.take_along_axis(logsm, target[:, None], axis=-1)[:, 0]
    pt = jnp.exp(logpt)
    logpt = logpt * alpha * (target > 0) + logpt * (1 - alpha) * (target <= 0)
    loss = -1.0 * (1.0 - pt) ** gamma * logpt
    return loss.mean() if size_average else loss.sum()


if __name__ == "__main__":
    key = jax.random.PRNGKey(0)
    k1, k2, k3, k4 = jax.random.split(key, 4)

    gamma, alpha = 2.0, 0.25

    # Case 1: tiny single-tile problem (8 samples, 16 relation classes).
    N1, C1 = 8, 16
    logits1 = jax.random.normal(k1, (N1, C1), dtype=jnp.float32)
    target1 = jax.random.randint(k2, (N1,), 0, C1, dtype=jnp.int32)
    out1 = jax.block_until_ready(
        focal_loss(logits1, target1, gamma=gamma, alpha=alpha, size_average=True))
    ref1 = _reference(logits1, target1, gamma, alpha, True)
    assert jnp.allclose(out1, ref1, atol=1e-5, rtol=1e-5), (out1, ref1)

    # Case 2: multi-tile grid with a ragged last tile (exercises pipelining,
    # padded-row masking and the sum reduction path).
    N2, C2 = 70, 51
    logits2 = jax.random.normal(k3, (N2, C2), dtype=jnp.float32)
    target2 = jax.random.randint(k4, (N2,), 0, C2, dtype=jnp.int32)
    out2 = jax.block_until_ready(
        focal_loss(logits2, target2, gamma=gamma, alpha=alpha,
                   size_average=False, tile_n=16))
    ref2 = _reference(logits2, target2, gamma, alpha, False)
    assert jnp.allclose(out2, ref2, atol=1e-4, rtol=1e-5), (out2, ref2)

    # TODO(synk): the module's `print(target)` debug statement is a host-side
    # side effect with no kernel equivalent and is intentionally omitted.
    print("KERNEL_OK")
</pallas_src>

<mosaic_0001>
module attributes {stable_mosaic.version = 11 : i64} {
  func.func @_focal_loss_kernel(%arg0: i32, %arg1: memref<8x16xf32, #tpu.memory_space<vmem>>, %arg2: memref<8x1xi32, #tpu.memory_space<vmem>>, %arg3: memref<1x1xf32, #tpu.memory_space<vmem>>) attributes {dimension_semantics = [#tpu.dimension_semantics<arbitrary>], iteration_bounds = array<i64: 1>, scalar_prefetch = 0 : i64, scratch_operands = 0 : i64, tpu.core_type = #tpu.core_type<tc>, window_params = [{transform_indices = @transform_0, window_bounds = array<i64: 8, 16>}, {transform_indices = @transform_1, window_bounds = array<i64: 8, 1>}, {pipeline_mode = #tpu.pipeline_mode<synchronous>, transform_indices = @transform_2, window_bounds = array<i64: 1, 1>}]} {
    %c0_i32 = arith.constant 0 : i32
    %0 = arith.cmpi eq, %arg0, %c0_i32 : i32
    %1 = arith.extui %0 : i1 to i32
    %c0_i32_0 = arith.constant 0 : i32
    %2 = arith.cmpi ne, %1, %c0_i32_0 : i32
    scf.if %2 {
      %cst_19 = arith.constant 0.000000e+00 : f32
      %42 = vector.broadcast %cst_19 : f32 to vector<1x1xf32>
      %c0_20 = arith.constant 0 : index
      %c0_21 = arith.constant 0 : index
      %43 = vector.load %arg3[%c0_20, %c0_21] : memref<1x1xf32, #tpu.memory_space<vmem>>, vector<1x1xf32>
      tpu.vector_store %arg3[%c0_20, %c0_21], %42 {strides = array<i32>} : memref<1x1xf32, #tpu.memory_space<vmem>>, vector<1x1xf32>,
    } else {
    }
    %c0 = arith.constant 0 : index
    %c0_1 = arith.constant 0 : index
    %3 = vector.load %arg1[%c0, %c0_1] : memref<8x16xf32, #tpu.memory_space<vmem>>, vector<8x16xf32>
    %c0_2 = arith.constant 0 : index
    %c0_3 = arith.constant 0 : index
    %4 = vector.load %arg2[%c0_2, %c0_3] : memref<8x1xi32, #tpu.memory_space<vmem>>, vector<8x1xi32>
    %cst = arith.constant dense<0xFF800000> : vector<8xf32>
    %5 = vector.multi_reduction <maximumf>, %3, %cst [1] : vector<8x16xf32> to vector<8xf32>
    %6 = vector.shape_cast %5 : vector<8xf32> to vector<8x1xf32>
    %7 = vector.broadcast %6 : vector<8x1xf32> to vector<8x16xf32>
    %8 = arith.subf %3, %7 : vector<8x16xf32>
    %9 = math.exp %8 : vector<8x16xf32>
    %cst_4 = arith.constant dense<0.000000e+00> : vector<8xf32>
    %10 = vector.multi_reduction <add>, %9, %cst_4 [1] : vector<8x16xf32> to vector<8xf32>
    %11 = vector.shape_cast %10 : vector<8xf32> to vector<8x1xf32>
    %12 = math.log %11 : vector<8x1xf32>
    %13 = tpu.iota {dimensions = array<i32: 1>} : vector<8x16xi32>
    %14 = vector.broadcast %4 : vector<8x1xi32> to vector<8x16xi32>
    %15 = arith.cmpi eq, %13, %14 : vector<8x16xi32>
    %cst_5 = arith.constant 0.000000e+00 : f32
    %16 = vector.broadcast %cst_5 : f32 to vector<8x16xf32>
    %17 = arith.select %15, %8, %16 : vector<8x16xi1>, vector<8x16xf32>
    %cst_6 = arith.constant dense<0.000000e+00> : vector<8xf32>
    %18 = vector.multi_reduction <add>, %17, %cst_6 [1] : vector<8x16xf32> to vector<8xf32>
    %19 = vector.shape_cast %18 : vector<8xf32> to vector<8x1xf32>
    %20 = arith.subf %19, %12 : vector<8x1xf32>
    %c0_i32_7 = arith.constant 0 : i32
    %21 = vector.broadcast %c0_i32_7 : i32 to vector<8x1xi32>
    %22 = arith.cmpi sgt, %4, %21 : vector<8x1xi32>
    %cst_8 = arith.constant 2.500000e-01 : f32
    %cst_9 = arith.constant 7.500000e-01 : f32
    %23 = vector.broadcast %cst_8 : f32 to vector<8x1xf32>
    %24 = vector.broadcast %cst_9 : f32 to vector<8x1xf32>
    %25 = arith.select %22, %23, %24 : vector<8x1xi1>, vector<8x1xf32>
    %26 = arith.mulf %20, %25 : vector<8x1xf32>
    %27 = math.exp %20 : vector<8x1xf32>
    %cst_10 = arith.constant 1.000000e+00 : f32
    %28 = vector.broadcast %cst_10 : f32 to vector<8x1xf32>
    %29 = arith.subf %28, %27 : vector<8x1xf32>
    %30 = arith.mulf %29, %29 : vector<8x1xf32>
    %cst_11 = arith.constant 0.000000e+00 : f32
    %31 = vector.broadcast %cst_11 : f32 to vector<8x1xf32>
    %32 = arith.subf %31, %30 : vector<8x1xf32>
    %33 = arith.mulf %32, %26 : vector<8x1xf32>
    %c0_12 = arith.constant 0 : index
    %c0_13 = arith.constant 0 : index
    %34 = vector.load %arg3[%c0_12, %c0_13] : memref<1x1xf32, #tpu.memory_space<vmem>>, vector<1x1xf32>
    %cst_14 = arith.constant dense<0.000000e+00> : vector<1xf32>
    %35 = vector.multi_reduction <add>, %33, %cst_14 [0] : vector<8x1xf32> to vector<1xf32>
    %36 = vector.shape_cast %35 : vector<1xf32> to vector<1x1xf32>
    %37 = arith.addf %34, %36 : vector<1x1xf32>
    %c0_15 = arith.constant 0 : index
    %c0_16 = arith.constant 0 : index
    %38 = vector.load %arg3[%c0_15, %c0_16] : memref<1x1xf32, #tpu.memory_space<vmem>>, vector<1x1xf32>
    tpu.vector_store %arg3[%c0_15, %c0_16], %37 {strides = array<i32>} : memref<1x1xf32, #tpu.memory_space<vmem>>, vector<1x1xf32>,
    %c0_i32_17 = arith.constant 0 : i32
    %39 = arith.cmpi eq, %arg0, %c0_i32_17 : i32
    %40 = arith.extui %39 : i1 to i32
    %c0_i32_18 = arith.constant 0 : i32
    %41 = arith.cmpi ne, %40, %c0_i32_18 : i32
    scf.if %41 {
      %c0_19 = arith.constant 0 : index
      %c0_20 = arith.constant 0 : index
      %42 = vector.load %arg3[%c0_19, %c0_20] : memref<1x1xf32, #tpu.memory_space<vmem>>, vector<1x1xf32>
      %cst_21 = arith.constant 1.250000e-01 : f32
      %43 = vector.broadcast %cst_21 : f32 to vector<1x1xf32>
      %44 = arith.mulf %42, %43 : vector<1x1xf32>
      %c0_22 = arith.constant 0 : index
      %c0_23 = arith.constant 0 : index
      %45 = vector.load %arg3[%c0_22, %c0_23] : memref<1x1xf32, #tpu.memory_space<vmem>>, vector<1x1xf32>
      tpu.vector_store %arg3[%c0_22, %c0_23], %44 {strides = array<i32>} : memref<1x1xf32, #tpu.memory_space<vmem>>, vector<1x1xf32>,
    } else {
    }
    return
  }
  func.func @transform_0(%arg0: i32) -> (i32, i32) {
    %c0_i32 = arith.constant 0 : i32
    %c0_i32_0 = arith.constant 0 : i32
    return %arg0, %c0_i32 : i32, i32
  }
  func.func @transform_1(%arg0: i32) -> (i32, i32) {
    %c0_i32 = arith.constant 0 : i32
    %c0_i32_0 = arith.constant 0 : i32
    return %arg0, %c0_i32 : i32, i32
  }
  func.func @transform_2(%arg0: i32) -> (i32, i32) {
    %c0_i32 = arith.constant 0 : i32
    %c0_i32_0 = arith.constant 0 : i32
    %c0_i32_1 = arith.constant 0 : i32
    return %c0_i32, %c0_i32_0 : i32, i32
  }
}

</mosaic_0001>

<llo_original>
// kernel: tpu_custom_call.1
$region0: #{tpu_custom_call.1}
  #allocation0 [shape = 'u32[]', space=smem, size = 0x4, offset = 0x4, fixed_abs, tag = 'smem constant byte address 0x4 - core index']
  #allocation1 [shape = 'u32[144,128]{1,0:T(1,128)}', space=vmem, size = 0x12000, scoped, tag = 'internal scratch']
  %s0 = inlined_call_operand.vmem [shape: f32[8,16], index: 0, kind: input, shape index: {}]
  %s1 = inlined_call_operand.vmem [shape: s32[8,1], index: 1, kind: input, shape index: {}]
  %s2 = inlined_call_operand.hbm [shape: f32[1,1], index: 2, kind: output, shape index: {}]
  %s3 = sld [smem:[#allocation0]]
  $region26: #{tpu_custom_call.1} parent=0
    _
  %s5 = ssub.s32 1, %s3
  %s6 = scalar_select 0, %s5, %s3
  $region1: #{tpu_custom_call.1} parent=0
    #allocation2 [shape = 'u8[512]{0}', space=vmem, size = 0x400, scoped, tag = 'output window, operand 0, single buffered']
    #allocation3 [shape = 's32[1]{0}', space=sflag, size = 0x4, scoped, tag = 'scoped memory for tpu_custom_call.1']
    %7 = vsyncpa [#allocation3], 0
    // Predicated region
    $region2: #{tpu_custom_call.1} parent=1 // pred_check
      _
    $region3: #{tpu_custom_call.1} parent=1 // pred_check_branch
      %9 = sbr.rel (0) target = $region5
    $region4: #{tpu_custom_call.1} parent=1 // pred_region
      _
    $region5: #{tpu_custom_call.1} parent=1 // pred_fallthru
      _
    // Predicated region
    $region6: #{tpu_custom_call.1} parent=1 // pred_check
      _
    $region7: #{tpu_custom_call.1} parent=1 // pred_check_branch
      %11 = sbr.rel (0) target = $region9
    $region8: #{tpu_custom_call.1} parent=1 // pred_region
      _
    $region9: #{tpu_custom_call.1} parent=1 // pred_fallthru
      _
    %p12 = scmp.eq.s32.totalorder 0, 0
    // Predicated region
    $region10: #{tpu_custom_call.1} parent=1 // pred_check
      %p13 = pneg %p12
    $region11: #{tpu_custom_call.1} parent=1 // pred_check_branch
      %15 = sbr.rel (%p13) target = $region13
    $region12: #{tpu_custom_call.1} parent=1 // pred_region
      %vm16 = vcmask 0
      %17 = vst.msk [vmem:[#allocation2] sm:$0x1] %vm16, 0.0
    $region13: #{tpu_custom_call.1} parent=1 // pred_fallthru
      _
    %v18 = vld [vmem:[%s0] sm:$0xff]
    %v19 = vld [vmem:[%s1] sm:$0xff]
    %vm20 = vcmask 130048
    %v21 = vsel %vm20, %v18, -inf
    %22 = vmax.xlane.f32.xlu0 %v21
    %v23 = vpop.xlane.xlu0 %22
    %v24 = vsub.f32 %v18, %v23
    %v25 = vmul.f32 %v24, 1.442695
    %v26 = vpow.pop %v25
    %v27 = vsel %vm20, %v26, 0.0
    %28 = vadd.xlane.f32.xlu0 %v27
    %v29 = vpop.xlane.xlu0 %28
    %v30 = vlog2.pop %v29
    %v31 = vmul.f32 %v30, 0.6931472
    %v32 = vlaneseq
    %v33 = vand.u32 %v32, 127
    %34 = vset.pattern.permute.xlu0 0
    %35 = vperm.xlu0 %34, %v19
    %v36 = vpop.permute.xlu0 %35
    %vm37 = vcmp.eq.s32.totalorder %v33, %v36
    %v38 = vsel %vm37, %v24, 0.0
    %v39 = vsel %vm20, %v38, 0.0
    %40 = vadd.xlane.f32.xlu0 %v39
    %v41 = vpop.xlane.xlu0 %40
    %v42 = vsub.f32 %v41, %v31
    %vm43 = vcmp.gt.s32.totalorder %v19, 0
    %v44 = vsel %vm43, 0.25, 0.75
    %v45 = vmul.f32 %v42, %v44
    %v46 = vmul.f32 %v42, 1.442695
    %v47 = vpow.pop %v46
    %v48 = vsub.f32 1.0, %v47
    %v49 = vmul.f32 %v48, %v48
    %v50 = vsub.f32 0.0, %v49
    %v51 = vmul.f32 %v50, %v45
    %v52 = vld [vmem:[#allocation2] sm:$0x1]
    %vm53 = vcmask 7168
    %v54 = vsel %vm53, %v51, 0.0
    %v55 = vrot.slane %v54, 4
    %v56 = vadd.f32 %v54, %v55
    %v57 = vrot.slane %v56, 2
    %v58 = vadd.f32 %v56, %v57
    %v59 = vrot.slane %v58, 1
    %v60 = vadd.f32 %v58, %v59
    %v61 = vadd.f32 %v52, %v60
    %vm62 = vcmask 0
    %63 = vst.msk [vmem:[#allocation2] sm:$0x1] %vm62, %v61
    // Predicated region
    $region14: #{tpu_custom_call.1} parent=1 // pred_check
      %p64 = pneg %p12
    $region15: #{tpu_custom_call.1} parent=1 // pred_check_branch
      %66 = sbr.rel (%p64) target = $region17
    $region16: #{tpu_custom_call.1} parent=1 // pred_region
      %v67 = vld [vmem:[#allocation2] sm:$0x1]
      %v68 = vmul.f32 %v67, 0.125
      %69 = vst.msk [vmem:[#allocation2] sm:$0x1] %vm62, %v68
    $region17: #{tpu_custom_call.1} parent=1 // pred_fallthru
      _
    // Predicated region
    $region18: #{tpu_custom_call.1} parent=1 // pred_check
      _
    $region19: #{tpu_custom_call.1} parent=1 // pred_check_branch
      %71 = sbr.rel (0) target = $region21
    $region20: #{tpu_custom_call.1} parent=1 // pred_region
      %s73 = ssub.s32 16, 16
      %74 = vsyncadd [#allocation3], %s73
      %s76 = sshll.u32 [#allocation2], 4
      %s77 = int_to_ptr.vmem [resolvable:$true] %s76
      %79 = dma.vmem_to_hbm [thread:$0]  %s77, 16, %s2, [#allocation3]
    $region21: #{tpu_custom_call.1} parent=1 // pred_fallthru
      _
    // Predicated region
    $region22: #{tpu_custom_call.1} parent=1 // pred_check
      _
    $region23: #{tpu_custom_call.1} parent=1 // pred_check_branch
      %81 = sbr.rel (0) target = $region25
    $region24: #{tpu_custom_call.1} parent=1 // pred_region
      %82 = dma.done [#allocation3], 16
    $region25: #{tpu_custom_call.1} parent=1 // pred_fallthru
      _
    %83 = vsyncpa [#allocation3], 1

</llo_original>
